<compile_context>
chip_gen: v5e
topology: v5e:2x2
jax: 0.10.0
libtpu: 0.0.40
codegen_flags: <defaults>
</compile_context>

<pallas_src>
import jax
import jax.numpy as jnp
from jax.experimental import pallas as pl
from jax.experimental.pallas import tpu as pltpu

LANE = 128
B_PAD = 16                         # fixed padded batch (bf16 sublane tile); keep fixed per deployment
NEG_INF = -1e30
# > v5e's 16 MiB scoped default (needed for TN=8192), comfortably < v7x's 64 MiB physical VMEM.
VMEM_LIMIT_BYTES = 48 * 1024 * 1024


def _round_up(x, m):
    return (x + m - 1) // m * m


# ----------------------------- fused Pallas kernel ------------------------------

def rec_lse_kernel(x_ref, w_ref, badd_ref, tgt_emb_ref, emb_ref,
                   logz_ref, tgt_out_ref,
                   urep_ref, m_ref, l_ref, tgt_ref):
    j = pl.program_id(1)

    @pl.when(j == 0)
    def _init():
        # Fusion linear, once per core; result kept resident in VMEM as bf16.
        # TODO(synk): exact Fusion module source not provided; modeled as Linear on the concat
        # [sasrec_out, bart_hidden] (activation, if any, omitted). llm-item add + fusion bias
        # are folded into badd; badd[:, d] == 1 so the item bias rides the matmul.
        u = jnp.dot(x_ref[...], w_ref[...], preferred_element_type=jnp.float32) + badd_ref[...]
        u_bf = u.astype(jnp.bfloat16)
        urep_ref[...] = u_bf
        m_ref[...] = jnp.full_like(m_ref, NEG_INF)
        l_ref[...] = jnp.zeros_like(l_ref)
        # Target logit (incl. bias column), computed once from the pre-gathered target item row
        # with the same bf16 operands as the tile scores -> no per-step label gather / iota.
        tgt_ref[...] = jnp.sum(
            u_bf.astype(jnp.float32) * tgt_emb_ref[...].astype(jnp.float32),
            axis=-1, keepdims=True)

    # Score tile [B, TN]: bf16 x bf16 on the MXU, f32 accumulate.  The item bias and the NEG_INF
    # mask for padded item rows ride in column `d` of the table, so the only per-step vector work
    # is the online log-sum-exp below.
    score = jax.lax.dot_general(
        urep_ref[...], emb_ref[...],
        dimension_numbers=(((1,), (1,)), ((), ())),
        preferred_element_type=jnp.float32)

    m_old = m_ref[...]
    m_new = jnp.maximum(m_old, jnp.max(score, axis=-1, keepdims=True))
    l_ref[...] = jnp.exp(m_old - m_new) * l_ref[...] + jnp.sum(
        jnp.exp(score - m_new), axis=-1, keepdims=True)
    m_ref[...] = m_new

    @pl.when(j == pl.num_programs(1) - 1)
    def _finalize():
        # Partial results for this core's half of the item range; combined in a JAX epilogue.
        # (m/l/tgt for padded batch rows are finite but meaningless; they are dropped outside.)
        logz_ref[0] = m_ref[...] + jnp.log(l_ref[...])
        tgt_out_ref[0] = tgt_ref[...]


def recommend_lse(x_pad, w_pad, badd_pad, tgt_emb_pad, emb_pad_bf16, *, tn, num_cores):
    """Returns per-core partial (logZ, target_logit), each of shape [num_cores, b_pad, 1]."""
    b_pad, _ = x_pad.shape
    d_pad = w_pad.shape[1]
    n_pad = emb_pad_bf16.shape[0]
    nj = n_pad // (tn * num_cores)
    grid = (num_cores, nj)

    cost = pl.CostEstimate(
        flops=2 * b_pad * d_pad * n_pad + 2 * num_cores * b_pad * x_pad.shape[1] * d_pad,
        transcendentals=b_pad * n_pad,
        bytes_accessed=(emb_pad_bf16.size * 2 + tgt_emb_pad.size * 2
                        + (x_pad.size + w_pad.size + badd_pad.size) * 4))

    logz_parts, tgt_parts = pl.pallas_call(
        rec_lse_kernel,
        out_shape=(jax.ShapeDtypeStruct((num_cores, b_pad, 1), jnp.float32),
                   jax.ShapeDtypeStruct((num_cores, b_pad, 1), jnp.float32)),
        grid_spec=pltpu.PrefetchScalarGridSpec(
            num_scalar_prefetch=0,
            grid=grid,
            in_specs=[
                pl.BlockSpec(x_pad.shape, lambda c, j: (0, 0)),        # [B_pad, K_pad] f32 (pinned)
                pl.BlockSpec(w_pad.shape, lambda c, j: (0, 0)),        # [K_pad, D_pad] f32 (pinned)
                pl.BlockSpec(badd_pad.shape, lambda c, j: (0, 0)),     # [B_pad, D_pad] f32 (pinned)
                pl.BlockSpec(tgt_emb_pad.shape, lambda c, j: (0, 0)),  # [B_pad, D_pad] bf16 (pinned)
                pl.BlockSpec((tn, d_pad), lambda c, j: (c * nj + j, 0)),  # item table tile, bf16
            ],
            out_specs=(
                pl.BlockSpec((1, b_pad, 1), lambda c, j: (c, 0, 0)),   # partial logZ per core
                pl.BlockSpec((1, b_pad, 1), lambda c, j: (c, 0, 0)),   # target logit per core
            ),
            scratch_shapes=[
                pltpu.VMEM((b_pad, d_pad), jnp.bfloat16),  # user_rep (bf16, resident across tiles)
                pltpu.VMEM((b_pad, 1), jnp.float32),       # running max
                pltpu.VMEM((b_pad, 1), jnp.float32),       # running sum-exp
                pltpu.VMEM((b_pad, 1), jnp.float32),       # target logit
            ]),
        compiler_params=pltpu.CompilerParams(
            dimension_semantics=("parallel", "arbitrary"),
            vmem_limit_bytes=VMEM_LIMIT_BYTES),
        cost_estimate=cost,
    )(x_pad, w_pad, badd_pad, tgt_emb_pad, emb_pad_bf16)
    return logz_parts, tgt_parts


# ------------------------------- params & padding --------------------------------

def init_params(key, *, vocab, d_model, hidden_size, item_num, emb_dim):
    ks = jax.random.split(key, 6)

    def xavier(k, shp):
        lim = jnp.sqrt(6.0 / (shp[0] + shp[1]))
        return jax.random.uniform(k, shp, jnp.float32, -lim, lim)

    bias_bound = emb_dim ** -0.5       # nn.Linear(300, item_num).bias default init range
    return {
        # TODO(synk): stand-in for pretrained BART decoder; real weights not loadable here.
        "bart_embed": 0.02 * jax.random.normal(ks[0], (vocab, d_model), jnp.float32),
        "item_embedding": xavier(ks[1], (item_num, emb_dim)),
        "item_bias_b": jax.random.uniform(ks[2], (item_num,), jnp.float32,
                                          -bias_bound, bias_bound),
        "fusion_w_sas": xavier(ks[3], (hidden_size, emb_dim)),
        "fusion_w_bart": xavier(ks[4], (d_model, emb_dim)),
        "fusion_b": jnp.zeros((emb_dim,), jnp.float32),
        # TODO(synk): stand-in projection for the SASRec transformer encoder.
        "sasrec_proj": xavier(ks[5], (emb_dim, hidden_size)),
    }


def prepare_rec_params(params, *, tn_target=8192, num_cores=2):
    """One-time padding/packing of the recommendation head for the Pallas kernel.

    TN=8192 (bf16 x D_pad=384) is 6 MiB per buffer, 12 MiB double-buffered -- the per-step
    pipeline overhead (~0.35 us) stays <5% of the DMA window on v5e/v6e/v7x.  Bigger is better
    on v7x (fastest HBM -> shortest DMA window); vmem_limit_bytes is raised accordingly.
    """
    emb = params["item_embedding"]                       # [N, 300]
    n_items, d = emb.shape
    hidden = params["fusion_w_sas"].shape[0]
    d_model = params["fusion_w_bart"].shape[0]

    d_pad = _round_up(d + 1, LANE)                       # 300 -> 384; column `d` carries the bias
    k_pad = _round_up(hidden + d_model, LANE)            # fused Fusion contraction dim
    tn = min(tn_target, _round_up(n_items, LANE))
    n_pad = _round_up(n_items, tn * num_cores)

    # Item table in bf16 with the bias folded into column `d`; padded item rows get NEG_INF
    # there so padded columns score -inf with zero per-step masking work.
    emb_pad = jnp.zeros((n_pad, d_pad), jnp.float32)
    emb_pad = emb_pad.at[:n_items, :d].set(emb)
    emb_pad = emb_pad.at[:n_items, d].set(params["item_bias_b"])
    emb_pad = emb_pad.at[n_items:, d].set(NEG_INF)

    w_fused = jnp.zeros((k_pad, d_pad), jnp.float32)
    w_fused = w_fused.at[:hidden, :d].set(params["fusion_w_sas"])
    w_fused = w_fused.at[hidden:hidden + d_model, :d].set(params["fusion_w_bart"])

    badd = jnp.zeros((d_pad,), jnp.float32).at[:d].set(params["fusion_b"])
    badd = badd.at[d].set(1.0)                           # user_rep[:, d] == 1 -> bias rides matmul

    return {
        "item_emb_pad_bf16": emb_pad.astype(jnp.bfloat16),
        "w_fused_pad": w_fused,
        "fusion_badd_pad": badd,
        "tn": tn, "num_cores": num_cores,
        "n_items": n_items, "n_pad": n_pad,
        "d": d, "d_pad": d_pad,
        "hidden": hidden, "d_model": d_model, "k_pad": k_pad,
    }


# ------------------------------- model glue --------------------------------

def _encode_inputs(params, input_ids, sids, item_id2index, sid2seq):
    B = input_ids.shape[0]

    # ---- BART decoder_hidden_states[-1] stand-in + EOS (token 102) gather ----
    # TODO(synk): full BartForConditionalGeneration forward has no clean Pallas equivalent here.
    dec_hidden = params["bart_embed"][input_ids]                       # [B, S, d_model]
    eos_pos = jnp.argmax((input_ids == 102).astype(jnp.int32), axis=1)
    hidden_state = dec_hidden[jnp.arange(B), eos_pos]                  # [B, d_model]

    # ---- fusion_historical_behaviors: padded history (python glue, as in the module) ----
    historical_actions = [sid2seq[sid] for sid in sids]
    his_idx = [[item_id2index[i] for i in h if i in item_id2index] for h in historical_actions]
    max_len = max(max(len(h) for h in his_idx), 1)
    his_ids = jnp.array([h + [0] * (max_len - len(h)) for h in his_idx], jnp.int32)
    his_mask = jnp.array([[1.0] * len(h) + [0.0] * (max_len - len(h)) for h in his_idx],
                         jnp.float32)

    # SASRec stand-in: masked mean of item embeddings -> hidden_size projection.
    # TODO(synk): real SASRecModel (self-attention stack) not provided; stand-in keeps shapes.
    his_emb = params["item_embedding"][his_ids]                        # [B, L, 300]
    m = his_mask[..., None]
    pooled = (his_emb * m).sum(1) / jnp.maximum(m.sum(1), 1.0)         # [B, 300]
    sequence_output = jnp.tanh(pooled @ params["sasrec_proj"])         # [B, hidden_size]
    return sequence_output, hidden_state


def bartcrs_forward(params, rec, input_ids, attention_mask, item_ids, llm_item_ids, sids,
                    item_id2index, sid2seq):
    B = input_ids.shape[0]
    del attention_mask  # only consumed by the real BART forward (stand-in above)

    sequence_output, hidden_state = _encode_inputs(params, input_ids, sids, item_id2index, sid2seq)

    d, d_pad, k_pad = rec["d"], rec["d_pad"], rec["k_pad"]
    hidden, d_model = rec["hidden"], rec["d_model"]
    b_pad = _round_up(max(B, 1), B_PAD)

    # ---- pack/pad inputs for the fused Pallas kernel ----
    x = jnp.concatenate([sequence_output, hidden_state], axis=-1)       # [B, hidden + d_model]
    x_pad = jnp.zeros((b_pad, k_pad), jnp.float32).at[:B, :hidden + d_model].set(x)

    badd_pad = jnp.broadcast_to(rec["fusion_badd_pad"][None, :], (b_pad, d_pad))
    if llm_item_ids is not None:
        llm_idx = jnp.array([item_id2index[i] for i in llm_item_ids], jnp.int32)
        badd_pad = badd_pad.at[:B, :d].add(params["item_embedding"][llm_idx])  # fold llm add in

    labels = jnp.array([item_id2index[i] for i in item_ids], jnp.int32)
    tgt_rows = rec["item_emb_pad_bf16"][labels]                         # [B, d_pad] (incl. bias)
    tgt_emb_pad = jnp.zeros((b_pad, d_pad), jnp.bfloat16).at[:B].set(tgt_rows)

    logz_parts, tgt_parts = recommend_lse(
        x_pad, rec["w_fused_pad"], badd_pad, tgt_emb_pad, rec["item_emb_pad_bf16"],
        tn=rec["tn"], num_cores=rec["num_cores"])

    # ---- tiny JAX epilogue: combine per-core partial log-sum-exps and form the CE loss ----
    parts = logz_parts[:, :B, 0]                                        # [NC, B]
    mx = jnp.max(parts, axis=0)
    logz = mx + jnp.log(jnp.sum(jnp.exp(parts - mx), axis=0))           # [B]
    tgt = tgt_parts[0, :B, 0]                                           # [B]
    return jnp.mean(logz - tgt)


def bartcrs_forward_ref(params, input_ids, attention_mask, item_ids, llm_item_ids, sids,
                        item_id2index, sid2seq):
    """Pure-JAX f32 reference of the same forward (for tolerance checking)."""
    B = input_ids.shape[0]
    del attention_mask
    seq_out, hid = _encode_inputs(params, input_ids, sids, item_id2index, sid2seq)
    user_rep = seq_out @ params["fusion_w_sas"] + hid @ params["fusion_w_bart"] + params["fusion_b"]
    if llm_item_ids is not None:
        llm_idx = jnp.array([item_id2index[i] for i in llm_item_ids], jnp.int32)
        user_rep = user_rep + params["item_embedding"][llm_idx]
    score = user_rep @ params["item_embedding"].T + params["item_bias_b"]
    labels = jnp.array([item_id2index[i] for i in item_ids], jnp.int32)
    mx = jnp.max(score, axis=-1)
    logz = mx + jnp.log(jnp.sum(jnp.exp(score - mx[:, None]), axis=-1))
    tgt = score[jnp.arange(B), labels]
    return jnp.mean(logz - tgt)


# --------------------------------- driver ----------------------------------

if __name__ == "__main__":
    B, S = 2, 8
    vocab = 128
    d_model = 32          # bart.config.d_model (small synthetic)
    hidden_size = 32      # args.hidden_size (SASRec)
    item_num = 64         # args.item_num
    emb_dim = 300         # item embedding dim (hardcoded in module)

    key = jax.random.PRNGKey(0)
    kp, ki = jax.random.split(key)
    params = init_params(kp, vocab=vocab, d_model=d_model, hidden_size=hidden_size,
                         item_num=item_num, emb_dim=emb_dim)
    rec = prepare_rec_params(params)

    # synthetic vocabularies / lookup tables (replace the pickled dicts)
    item_id2index = {1000 + i: i for i in range(item_num)}
    sid2seq = {"s0": [1001, 1002, 1003], "s1": [1004, 1005]}

    input_ids = jax.random.randint(ki, (B, S), 0, vocab, jnp.int32)
    input_ids = input_ids.at[:, 5].set(102)        # one EOS (token 102) per row
    attention_mask = jnp.ones((B, S), jnp.int32)

    item_ids = [1005, 1010]                        # recommendation targets
    llm_item_ids = [1003, 1007]
    sids = ["s0", "s1"]

    loss = bartcrs_forward(params, rec, input_ids, attention_mask,
                           item_ids, llm_item_ids, sids, item_id2index, sid2seq)
    jax.block_until_ready(loss)

    ref = bartcrs_forward_ref(params, input_ids, attention_mask,
                              item_ids, llm_item_ids, sids, item_id2index, sid2seq)
    assert loss.shape == () and bool(jnp.isfinite(loss))
    assert abs(float(loss) - float(ref)) < 5e-2, (float(loss), float(ref))
    print("KERNEL_OK")
</pallas_src>

<mosaic_0001>
module attributes {stable_mosaic.version = 11 : i64} {
  func.func @rec_lse_kernel(%arg0: i32, %arg1: i32, %arg2: memref<16x128xf32, #tpu.memory_space<vmem>>, %arg3: memref<128x384xf32, #tpu.memory_space<vmem>>, %arg4: memref<16x384xf32, #tpu.memory_space<vmem>>, %arg5: memref<16x384xbf16, #tpu.memory_space<vmem>>, %arg6: memref<128x384xbf16, #tpu.memory_space<vmem>>, %arg7: memref<1x16x1xf32, #tpu.memory_space<vmem>>, %arg8: memref<1x16x1xf32, #tpu.memory_space<vmem>>, %arg9: memref<16x384xbf16, #tpu.memory_space<vmem>>, %arg10: memref<16x1xf32, #tpu.memory_space<vmem>>, %arg11: memref<16x1xf32, #tpu.memory_space<vmem>>, %arg12: memref<16x1xf32, #tpu.memory_space<vmem>>) attributes {dimension_semantics = [#tpu.dimension_semantics<parallel>, #tpu.dimension_semantics<arbitrary>], iteration_bounds = array<i64: 2, 1>, scalar_prefetch = 0 : i64, scratch_operands = 4 : i64, tpu.core_type = #tpu.core_type<tc>, window_params = [{pipeline_mode = #tpu.pipeline_mode<synchronous>, transform_indices = @transform_0, window_bounds = array<i64: 16, 128>}, {pipeline_mode = #tpu.pipeline_mode<synchronous>, transform_indices = @transform_1, window_bounds = array<i64: 128, 384>}, {pipeline_mode = #tpu.pipeline_mode<synchronous>, transform_indices = @transform_2, window_bounds = array<i64: 16, 384>}, {pipeline_mode = #tpu.pipeline_mode<synchronous>, transform_indices = @transform_3, window_bounds = array<i64: 16, 384>}, {transform_indices = @transform_4, window_bounds = array<i64: 128, 384>}, {transform_indices = @transform_5, window_bounds = array<i64: 1, 16, 1>}, {transform_indices = @transform_6, window_bounds = array<i64: 1, 16, 1>}]} {
    %c0_i32 = arith.constant 0 : i32
    %0 = arith.cmpi eq, %arg1, %c0_i32 : i32
    %1 = arith.extui %0 : i1 to i32
    %c0_i32_0 = arith.constant 0 : i32
    %2 = arith.cmpi ne, %1, %c0_i32_0 : i32
    scf.if %2 {
      %c0_16 = arith.constant 0 : index
      %c0_17 = arith.constant 0 : index
      %25 = vector.load %arg2[%c0_16, %c0_17] : memref<16x128xf32, #tpu.memory_space<vmem>>, vector<16x128xf32>
      %c0_18 = arith.constant 0 : index
      %c0_19 = arith.constant 0 : index
      %26 = vector.load %arg3[%c0_18, %c0_19] : memref<128x384xf32, #tpu.memory_space<vmem>>, vector<128x384xf32>
      %cst_20 = arith.constant dense<0.000000e+00> : vector<16x384xf32>
      %27 = tpu.matmul %25, %26, %cst_20 {dimension_numbers = #tpu.dot_dimension_numbers<[1], [0], [0], [1], [0, 0, 1, 1], [], []>} : vector<16x128xf32>, vector<128x384xf32>, vector<16x384xf32> -> vector<16x384xf32>
      %c0_21 = arith.constant 0 : index
      %c0_22 = arith.constant 0 : index
      %28 = vector.load %arg4[%c0_21, %c0_22] : memref<16x384xf32, #tpu.memory_space<vmem>>, vector<16x384xf32>
      %29 = arith.addf %27, %28 : vector<16x384xf32>
      %30 = arith.truncf %29 : vector<16x384xf32> to vector<16x384xbf16>
      %c0_23 = arith.constant 0 : index
      %c0_24 = arith.constant 0 : index
      %31 = vector.load %arg9[%c0_23, %c0_24] : memref<16x384xbf16, #tpu.memory_space<vmem>>, vector<16x384xbf16>
      tpu.vector_store %arg9[%c0_23, %c0_24], %30 {strides = array<i32>} : memref<16x384xbf16, #tpu.memory_space<vmem>>, vector<16x384xbf16>,
      %cst_25 = arith.constant -1.000000e+30 : f32
      %32 = vector.broadcast %cst_25 : f32 to vector<16x1xf32>
      %c0_26 = arith.constant 0 : index
      %c0_27 = arith.constant 0 : index
      %33 = vector.load %arg10[%c0_26, %c0_27] : memref<16x1xf32, #tpu.memory_space<vmem>>, vector<16x1xf32>
      tpu.vector_store %arg10[%c0_26, %c0_27], %32 {strides = array<i32>} : memref<16x1xf32, #tpu.memory_space<vmem>>, vector<16x1xf32>,
      %cst_28 = arith.constant 0.000000e+00 : f32
      %34 = vector.broadcast %cst_28 : f32 to vector<16x1xf32>
      %c0_29 = arith.constant 0 : index
      %c0_30 = arith.constant 0 : index
      %35 = vector.load %arg11[%c0_29, %c0_30] : memref<16x1xf32, #tpu.memory_space<vmem>>, vector<16x1xf32>
      tpu.vector_store %arg11[%c0_29, %c0_30], %34 {strides = array<i32>} : memref<16x1xf32, #tpu.memory_space<vmem>>, vector<16x1xf32>,
      %36 = arith.extf %30 : vector<16x384xbf16> to vector<16x384xf32>
      %c0_31 = arith.constant 0 : index
      %c0_32 = arith.constant 0 : index
      %37 = vector.load %arg5[%c0_31, %c0_32] : memref<16x384xbf16, #tpu.memory_space<vmem>>, vector<16x384xbf16>
      %38 = arith.extf %37 : vector<16x384xbf16> to vector<16x384xf32>
      %39 = arith.mulf %36, %38 : vector<16x384xf32>
      %cst_33 = arith.constant dense<0.000000e+00> : vector<16xf32>
      %40 = vector.multi_reduction <add>, %39, %cst_33 [1] : vector<16x384xf32> to vector<16xf32>
      %41 = vector.shape_cast %40 : vector<16xf32> to vector<16x1xf32>
      %c0_34 = arith.constant 0 : index
      %c0_35 = arith.constant 0 : index
      %42 = vector.load %arg12[%c0_34, %c0_35] : memref<16x1xf32, #tpu.memory_space<vmem>>, vector<16x1xf32>
      tpu.vector_store %arg12[%c0_34, %c0_35], %41 {strides = array<i32>} : memref<16x1xf32, #tpu.memory_space<vmem>>, vector<16x1xf32>,
    } else {
    }
    %c0 = arith.constant 0 : index
    %c0_1 = arith.constant 0 : index
    %3 = vector.load %arg9[%c0, %c0_1] : memref<16x384xbf16, #tpu.memory_space<vmem>>, vector<16x384xbf16>
    %c0_2 = arith.constant 0 : index
    %c0_3 = arith.constant 0 : index
    %4 = vector.load %arg6[%c0_2, %c0_3] : memref<128x384xbf16, #tpu.memory_space<vmem>>, vector<128x384xbf16>
    %cst = arith.constant dense<0.000000e+00> : vector<16x128xf32>
    %5 = tpu.matmul %3, %4, %cst {dimension_numbers = #tpu.dot_dimension_numbers<[1], [1], [0], [0], [0, 0, 1, 0], [], []>} : vector<16x384xbf16>, vector<128x384xbf16>, vector<16x128xf32> -> vector<16x128xf32>
    %c0_4 = arith.constant 0 : index
    %c0_5 = arith.constant 0 : index
    %6 = vector.load %arg10[%c0_4, %c0_5] : memref<16x1xf32, #tpu.memory_space<vmem>>, vector<16x1xf32>
    %cst_6 = arith.constant dense<0xFF800000> : vector<16xf32>
    %7 = vector.multi_reduction <maximumf>, %5, %cst_6 [1] : vector<16x128xf32> to vector<16xf32>
    %8 = vector.shape_cast %7 : vector<16xf32> to vector<16x1xf32>
    %9 = arith.maximumf %6, %8 : vector<16x1xf32>
    %10 = arith.subf %6, %9 : vector<16x1xf32>
    %11 = math.exp %10 : vector<16x1xf32>
    %c0_7 = arith.constant 0 : index
    %c0_8 = arith.constant 0 : index
    %12 = vector.load %arg11[%c0_7, %c0_8] : memref<16x1xf32, #tpu.memory_space<vmem>>, vector<16x1xf32>
    %13 = arith.mulf %11, %12 : vector<16x1xf32>
    %14 = vector.broadcast %9 : vector<16x1xf32> to vector<16x128xf32>
    %15 = arith.subf %5, %14 : vector<16x128xf32>
    %16 = math.exp %15 : vector<16x128xf32>
    %cst_9 = arith.constant dense<0.000000e+00> : vector<16xf32>
    %17 = vector.multi_reduction <add>, %16, %cst_9 [1] : vector<16x128xf32> to vector<16xf32>
    %18 = vector.shape_cast %17 : vector<16xf32> to vector<16x1xf32>
    %19 = arith.addf %13, %18 : vector<16x1xf32>
    %c0_10 = arith.constant 0 : index
    %c0_11 = arith.constant 0 : index
    %20 = vector.load %arg11[%c0_10, %c0_11] : memref<16x1xf32, #tpu.memory_space<vmem>>, vector<16x1xf32>
    tpu.vector_store %arg11[%c0_10, %c0_11], %19 {strides = array<i32>} : memref<16x1xf32, #tpu.memory_space<vmem>>, vector<16x1xf32>,
    %c0_12 = arith.constant 0 : index
    %c0_13 = arith.constant 0 : index
    %21 = vector.load %arg10[%c0_12, %c0_13] : memref<16x1xf32, #tpu.memory_space<vmem>>, vector<16x1xf32>
    tpu.vector_store %arg10[%c0_12, %c0_13], %9 {strides = array<i32>} : memref<16x1xf32, #tpu.memory_space<vmem>>, vector<16x1xf32>,
    %c0_i32_14 = arith.constant 0 : i32
    %22 = arith.cmpi eq, %arg1, %c0_i32_14 : i32
    %23 = arith.extui %22 : i1 to i32
    %c0_i32_15 = arith.constant 0 : i32
    %24 = arith.cmpi ne, %23, %c0_i32_15 : i32
    scf.if %24 {
      %c0_16 = arith.constant 0 : index
      %c0_17 = arith.constant 0 : index
      %25 = vector.load %arg10[%c0_16, %c0_17] : memref<16x1xf32, #tpu.memory_space<vmem>>, vector<16x1xf32>
      %c0_18 = arith.constant 0 : index
      %c0_19 = arith.constant 0 : index
      %26 = vector.load %arg11[%c0_18, %c0_19] : memref<16x1xf32, #tpu.memory_space<vmem>>, vector<16x1xf32>
      %27 = math.log %26 : vector<16x1xf32>
      %28 = arith.addf %25, %27 : vector<16x1xf32>
      %c0_20 = arith.constant 0 : index
      %c0_21 = arith.constant 0 : index
      %c0_22 = arith.constant 0 : index
      %29 = vector.load %arg7[%c0_20, %c0_21, %c0_22] : memref<1x16x1xf32, #tpu.memory_space<vmem>>, vector<1x16x1xf32>
      %30 = vector.shape_cast %29 : vector<1x16x1xf32> to vector<16x1xf32>
      %31 = vector.shape_cast %28 : vector<16x1xf32> to vector<1x16x1xf32>
      tpu.vector_store %arg7[%c0_20, %c0_21, %c0_22], %31 {strides = array<i32>} : memref<1x16x1xf32, #tpu.memory_space<vmem>>, vector<1x16x1xf32>,
      %c0_23 = arith.constant 0 : index
      %c0_24 = arith.constant 0 : index
      %32 = vector.load %arg12[%c0_23, %c0_24] : memref<16x1xf32, #tpu.memory_space<vmem>>, vector<16x1xf32>
      %c0_25 = arith.constant 0 : index
      %c0_26 = arith.constant 0 : index
      %c0_27 = arith.constant 0 : index
      %33 = vector.load %arg8[%c0_25, %c0_26, %c0_27] : memref<1x16x1xf32, #tpu.memory_space<vmem>>, vector<1x16x1xf32>
      %34 = vector.shape_cast %33 : vector<1x16x1xf32> to vector<16x1xf32>
      %35 = vector.shape_cast %32 : vector<16x1xf32> to vector<1x16x1xf32>
      tpu.vector_store %arg8[%c0_25, %c0_26, %c0_27], %35 {strides = array<i32>} : memref<1x16x1xf32, #tpu.memory_space<vmem>>, vector<1x16x1xf32>,
    } else {
    }
    return
  }
  func.func @transform_0(%arg0: i32, %arg1: i32) -> (i32, i32) {
    %c0_i32 = arith.constant 0 : i32
    %c0_i32_0 = arith.constant 0 : i32
    %c0_i32_1 = arith.constant 0 : i32
    return %c0_i32, %c0_i32_0 : i32, i32
  }
  func.func @transform_1(%arg0: i32, %arg1: i32) -> (i32, i32) {
    %c0_i32 = arith.constant 0 : i32
    %c0_i32_0 = arith.constant 0 : i32
    %c0_i32_1 = arith.constant 0 : i32
    return %c0_i32, %c0_i32_0 : i32, i32
  }
  func.func @transform_2(%arg0: i32, %arg1: i32) -> (i32, i32) {
    %c0_i32 = arith.constant 0 : i32
    %c0_i32_0 = arith.constant 0 : i32
    %c0_i32_1 = arith.constant 0 : i32
    return %c0_i32, %c0_i32_0 : i32, i32
  }
  func.func @transform_3(%arg0: i32, %arg1: i32) -> (i32, i32) {
    %c0_i32 = arith.constant 0 : i32
    %c0_i32_0 = arith.constant 0 : i32
    %c0_i32_1 = arith.constant 0 : i32
    return %c0_i32, %c0_i32_0 : i32, i32
  }
  func.func @transform_4(%arg0: i32, %arg1: i32) -> (i32, i32) {
    %c1_i32 = arith.constant 1 : i32
    %0 = arith.muli %arg0, %c1_i32 : i32
    %1 = arith.addi %0, %arg1 : i32
    %c0_i32 = arith.constant 0 : i32
    %c0_i32_0 = arith.constant 0 : i32
    return %1, %c0_i32 : i32, i32
  }
  func.func @transform_5(%arg0: i32, %arg1: i32) -> (i32, i32, i32) {
    %c0_i32 = arith.constant 0 : i32
    %c0_i32_0 = arith.constant 0 : i32
    %c0_i32_1 = arith.constant 0 : i32
    return %arg0, %c0_i32, %c0_i32_0 : i32, i32, i32
  }
  func.func @transform_6(%arg0: i32, %arg1: i32) -> (i32, i32, i32) {
    %c0_i32 = arith.constant 0 : i32
    %c0_i32_0 = arith.constant 0 : i32
    %c0_i32_1 = arith.constant 0 : i32
    return %arg0, %c0_i32, %c0_i32_0 : i32, i32, i32
  }
}

</mosaic_0001>

<llo_original>
// kernel: tpu_custom_call.1
$region0: #{tpu_custom_call.1}
  #allocation0 [shape = 'u32[]', space=smem, size = 0x4, offset = 0x4, fixed_abs, tag = 'smem constant byte address 0x4 - core index']
  #allocation1 [shape = 'u32[72,128]{1,0:T(1,128)}', space=vmem, size = 0x9000, scoped, tag = 'internal scratch']
  #allocation2 [shape = 'bf16[16,384]{1,0:T(8,128)(2,1)}', space=vmem, size = 0x3000, scoped, tag = 'scratch operand']
  #allocation3 [shape = 'f32[16,1]{1,0:T(8,128)}', space=vmem, size = 0x2000, scoped, tag = 'scratch operand']
  #allocation4 [shape = 'f32[16,1]{1,0:T(8,128)}', space=vmem, size = 0x2000, scoped, tag = 'scratch operand']
  #allocation5 [shape = 'f32[16,1]{1,0:T(8,128)}', space=vmem, size = 0x2000, scoped, tag = 'scratch operand']
  %s0 = inlined_call_operand.hbm [shape: f32[16,128], index: 0, kind: input, shape index: {}]
  %s1 = inlined_call_operand.hbm [shape: f32[128,384], index: 1, kind: input, shape index: {}]
  %s2 = inlined_call_operand.hbm [shape: f32[16,384], index: 2, kind: input, shape index: {}]
  %s3 = inlined_call_operand.hbm [shape: bf16[16,384], index: 3, kind: input, shape index: {}]
  %s4 = inlined_call_operand.hbm [shape: bf16[256,384], index: 4, kind: input, shape index: {}]
  %s5 = inlined_call_operand.vmem [shape: f32[2,16,1], index: 5, kind: output, shape index: {0}]
  %s6 = inlined_call_operand.vmem [shape: f32[2,16,1], index: 6, kind: output, shape index: {1}]
  %7 = xla_tuple %s5, %s6
  %s8 = sld [smem:[#allocation0]]
  $region89: #{tpu_custom_call.1} parent=0
    _
  %s10 = ssub.s32 1, %s8
  %s11 = scalar_select 0, %s10, %s8
  $region1: #{tpu_custom_call.1} parent=0
    #allocation6 [shape = 'u8[8192]{0}', space=vmem, size = 0x2000, scoped, tag = 'input window, operand 0, single buffered']
    #allocation7 [shape = 's32[2]{0}', space=sflag, size = 0x8, scoped, tag = 'scoped memory for tpu_custom_call.1']
    #allocation8 [shape = 'u8[196608]{0}', space=vmem, size = 0x30000, scoped, tag = 'input window, operand 1, single buffered']
    #allocation9 [shape = 's32[1]{0}', space=sflag, size = 0x4, scoped, tag = 'scoped memory for tpu_custom_call.1']
    #allocation10 [shape = 'u8[24576]{0}', space=vmem, size = 0x6000, scoped, tag = 'input window, operand 2, single buffered']
    #allocation11 [shape = 'u8[12288]{0}', space=vmem, size = 0x3000, scoped, tag = 'input window, operand 3, single buffered']
    #allocation12 [shape = 's32[1]{0}', space=sflag, size = 0x4, scoped, tag = 'scoped memory for tpu_custom_call.1']
    #allocation13 [shape = 'u8[196608]{0}', space=vmem, size = 0x30000, scoped, tag = 'input window, operand 4']
    %12 = vsyncpa [#allocation7], 0
    %13 = vsyncpa [#allocation9], 0
    %14 = vsyncpa [#allocation12], 0
    loop: start=0, step=1, limit=4
    $region2: #{tpu_custom_call.1} parent=1 // loop_pre_header
      _
    $region3: #{tpu_custom_call.1} parent=1 // loop_header
      %s16 = sphi 0, %s20
      %p17 = scmp.ge.s32.totalorder %s16, 4
      %s23 = sphi 0, %s35
      %s24 = sphi 0, %s31
      %s25 = sphi 0, %s23
      %s26 = sphi 0, %s24
      %s27 = sphi 0, %s25
      %s28 = sphi 0, %s26
      %s36 = sphi 0, %s36
      %s38 = sphi 0, %s36
      %s39 = sphi 0, %s38
      %s53 = sphi 0, %s39
      %s57 = sphi 0, %s57
      %s59 = sphi 0, %s57
      %s60 = sphi 0, %s59
      %s74 = sphi 0, %s60
      %s78 = sphi 0, %s78
      %s80 = sphi 0, %s78
      %s81 = sphi 0, %s80
      %s95 = sphi 0, %s81
      %s99 = sphi 0, %s99
      %s101 = sphi 0, %s99
      %s102 = sphi 0, %s101
      %s116 = sphi 0, %s102
      %s124 = sphi 0, %s126
      %s127 = sphi 0, %s124
      %s128 = sphi 0, %s127
      %s144 = sphi 0, %s128
      %s150 = sphi 0, %s152
      %s153 = sphi 0, %s150
      %s154 = sphi 0, %s153
      %s170 = sphi 0, %s154
      %s176 = sphi 0, %s178
      %s179 = sphi 0, %s176
      %s180 = sphi 0, %s179
      %s196 = sphi 0, %s180
    $region4: #{tpu_custom_call.1} parent=1 // loop_header_branch
      %19 = sbr.rel (%p17) target = $region8
    $region5: #{tpu_custom_call.1} parent=1 // loop_body
      %s21 = ssub.s32 %s16, 1
      %s22 = ssub.s32 %s16, 2
      %s29 = sadd.s32 1, %s24
      %p30 = scmp.ge.s32.totalorder %s29, 1
      %s31 = scalar_select %p30, 0, %s29
      %s32 = sadd.s32 1, %s23
      %s33 = scalar_select %p30, %s32, %s23
      %p34 = scmp.ge.s32.totalorder %s33, 2
      %s35 = scalar_select %p34, 0, %s33
      %s37 = sadd.s32 %s36, 1
      %p40 = scmp.eq.s32.totalorder %s16, 1
      %p41 = scmp.ne.s32.totalorder %s36, %s38
      %p42 = scmp.eq.s32.totalorder %s16, 0
      %p43 = por %p41, %p42
      %p44 = scmp.ne.s32.totalorder %s36, %s38
      %p45 = scmp.eq.s32.totalorder %s21, 1
      %p46 = por %p44, %p45
      %p47 = scmp.ne.s32.totalorder %s38, %s39
      %p48 = scmp.eq.s32.totalorder %s21, 0
      %p49 = por %p47, %p48
      %p50 = scmp.ne.s32.totalorder %s38, %s39
      %p51 = scmp.eq.s32.totalorder %s22, 1
      %p52 = por %p50, %p51
      %p54 = scmp.ne.s32.totalorder %s39, %s53
      %p55 = scmp.eq.s32.totalorder %s22, 0
      %p56 = por %p54, %p55
      %s58 = sadd.s32 %s57, 1
      %p61 = scmp.eq.s32.totalorder %s16, 1
      %p62 = scmp.ne.s32.totalorder %s57, %s59
      %p63 = scmp.eq.s32.totalorder %s16, 0
      %p64 = por %p62, %p63
      %p65 = scmp.ne.s32.totalorder %s57, %s59
      %p66 = scmp.eq.s32.totalorder %s21, 1
      %p67 = por %p65, %p66
      %p68 = scmp.ne.s32.totalorder %s59, %s60
      %p69 = scmp.eq.s32.totalorder %s21, 0
      %p70 = por %p68, %p69
      %p71 = scmp.ne.s32.totalorder %s59, %s60
      %p72 = scmp.eq.s32.totalorder %s22, 1
      %p73 = por %p71, %p72
      %p75 = scmp.ne.s32.totalorder %s60, %s74
      %p76 = scmp.eq.s32.totalorder %s22, 0
      %p77 = por %p75, %p76
      %s79 = sadd.s32 %s78, 1
      %p82 = scmp.eq.s32.totalorder %s16, 1
      %p83 = scmp.ne.s32.totalorder %s78, %s80
      %p84 = scmp.eq.s32.totalorder %s16, 0
      %p85 = por %p83, %p84
      %p86 = scmp.ne.s32.totalorder %s78, %s80
      %p87 = scmp.eq.s32.totalorder %s21, 1
      %p88 = por %p86, %p87
      %p89 = scmp.ne.s32.totalorder %s80, %s81
      %p90 = scmp.eq.s32.totalorder %s21, 0
      %p91 = por %p89, %p90
      %p92 = scmp.ne.s32.totalorder %s80, %s81
      %p93 = scmp.eq.s32.totalorder %s22, 1
      %p94 = por %p92, %p93
      %p96 = scmp.ne.s32.totalorder %s81, %s95
      %p97 = scmp.eq.s32.totalorder %s22, 0
      %p98 = por %p96, %p97
      %s100 = sadd.s32 %s99, 1
      %p103 = scmp.eq.s32.totalorder %s16, 1
      %p104 = scmp.ne.s32.totalorder %s99, %s101
      %p105 = scmp.eq.s32.totalorder %s16, 0
      %p106 = por %p104, %p105
      %p107 = scmp.ne.s32.totalorder %s99, %s101
      %p108 = scmp.eq.s32.totalorder %s21, 1
      %p109 = por %p107, %p108
      %p110 = scmp.ne.s32.totalorder %s101, %s102
      %p111 = scmp.eq.s32.totalorder %s21, 0
      %p112 = por %p110, %p111
      %p113 = scmp.ne.s32.totalorder %s101, %s102
      %p114 = scmp.eq.s32.totalorder %s22, 1
      %p115 = por %p113, %p114
      %p117 = scmp.ne.s32.totalorder %s102, %s116
      %p118 = scmp.eq.s32.totalorder %s22, 0
      %p119 = por %p117, %p118
      %s120 = sadd.s32 %s23, %s24
      %s121 = sadd.s32 %s35, %s31
      %s122 = ssub.s32 %s120, %s121
      %p123 = scmp.eq.s32.totalorder %s122, 0
      %s125 = sadd.s32 %s124, 1
      %s126 = scalar_select %p123, %s124, %s125
      %p129 = pneg %p123
      %p130 = scmp.eq.s32.totalorder %s16, 1
      %p131 = por %p129, %p130
      %p132 = scmp.ne.s32.totalorder %s124, %s127
      %p133 = scmp.eq.s32.totalorder %s16, 0
      %p134 = por %p132, %p133
      %p135 = scmp.ne.s32.totalorder %s124, %s127
      %p136 = scmp.eq.s32.totalorder %s21, 1
      %p137 = por %p135, %p136
      %p138 = scmp.ne.s32.totalorder %s127, %s128
      %p139 = scmp.eq.s32.totalorder %s21, 0
      %p140 = por %p138, %p139
      %p141 = scmp.ne.s32.totalorder %s127, %s128
      %p142 = scmp.eq.s32.totalorder %s22, 1
      %p143 = por %p141, %p142
      %p145 = scmp.ne.s32.totalorder %s128, %s144
      %p146 = scmp.eq.s32.totalorder %s22, 0
      %p147 = por %p145, %p146
      %s148 = ssub.s32 %s23, %s35
      %p149 = scmp.eq.s32.totalorder %s148, 0
      %s151 = sadd.s32 %s150, 1
      %s152 = scalar_select %p149, %s150, %s151
      %p155 = pneg %p149
      %p156 = scmp.eq.s32.totalorder %s16, 1
      %p157 = por %p155, %p156
      %p158 = scmp.ne.s32.totalorder %s150, %s153
      %p159 = scmp.eq.s32.totalorder %s16, 0
      %p160 = por %p158, %p159
      %p161 = scmp.ne.s32.totalorder %s150, %s153
      %p162 = scmp.eq.s32.totalorder %s21, 1
      %p163 = por %p161, %p162
      %p164 = scmp.ne.s32.totalorder %s153, %s154
      %p165 = scmp.eq.s32.totalorder %s21, 0
      %p166 = por %p164, %p165
      %p167 = scmp.ne.s32.totalorder %s153, %s154
      %p168 = scmp.eq.s32.totalorder %s22, 1
      %p169 = por %p167, %p168
      %p171 = scmp.ne.s32.totalorder %s154, %s170
      %p172 = scmp.eq.s32.totalorder %s22, 0
      %p173 = por %p171, %p172
      %s174 = ssub.s32 %s23, %s35
      %p175 = scmp.eq.s32.totalorder %s174, 0
      %s177 = sadd.s32 %s176, 1
      %s178 = scalar_select %p175, %s176, %s177
      %p181 = pneg %p175
      %p182 = scmp.eq.s32.totalorder %s16, 1
      %p183 = por %p181, %p182
      %p184 = scmp.ne.s32.totalorder %s176, %s179
      %p185 = scmp.eq.s32.totalorder %s16, 0
      %p186 = por %p184, %p185
      %p187 = scmp.ne.s32.totalorder %s176, %s179
      %p188 = scmp.eq.s32.totalorder %s21, 1
      %p189 = por %p187, %p188
      %p190 = scmp.ne.s32.totalorder %s179, %s180
      %p191 = scmp.eq.s32.totalorder %s21, 0
      %p192 = por %p190, %p191
      %p193 = scmp.ne.s32.totalorder %s179, %s180
      %p194 = scmp.eq.s32.totalorder %s22, 1
      %p195 = por %p193, %p194
      %p197 = scmp.ne.s32.totalorder %s180, %s196
      %p198 = scmp.eq.s32.totalorder %s22, 0
      %p199 = por %p197, %p198
      %p200 = scmp.le.s32.totalorder 1, %s16
      %p201 = scmp.lt.s32.totalorder %s16, 3
      %p202 = pnand %p200, %p201
      %p203 = pneg %p202
      // Predicated region
      $region9: #{tpu_custom_call.1} parent=5 // pred_check
        _
      $region10: #{tpu_custom_call.1} parent=5 // pred_check_branch
        %205 = sbr.rel (%p202) target = $region12
      $region11: #{tpu_custom_call.1} parent=5 // pred_region
        %s206 = ssub.s32 %s16, 1
        // Predicated region
        $region13: #{tpu_custom_call.1} parent=11 // pred_check
          %p207 = pneg %p49
        $region14: #{tpu_custom_call.1} parent=11 // pred_check_branch
          %209 = sbr.rel (%p207) target = $region16
        $region15: #{tpu_custom_call.1} parent=11 // pred_region
          %211 = vsyncadd [#allocation7], 0
          %s212 = sshll.u32 %s0, 4
          %s213 = int_to_ptr.hbm [resolvable:$true] %s212
          %s214 = sshll.u32 [#allocation6], 4
          %s215 = int_to_ptr.vmem [resolvable:$true] %s214
          %220 = dma.hbm_to_vmem [thread:$0]  %s213, 256, %s215, [#allocation7], 128, 128, 8
        $region16: #{tpu_custom_call.1} parent=11 // pred_fallthru
          _
        // Predicated region
        $region17: #{tpu_custom_call.1} parent=11 // pred_check
          %p221 = pneg %p70
        $region18: #{tpu_custom_call.1} parent=11 // pred_check_branch
          %223 = sbr.rel (%p221) target = $region20
        $region19: #{tpu_custom_call.1} parent=11 // pred_region
          %225 = vsyncadd [#allocation9], 0
          %s226 = sshll.u32 %s1, 4
          %s227 = int_to_ptr.hbm [resolvable:$true] %s226
          %s228 = sshll.u32 [#allocation8], 4
          %s229 = int_to_ptr.vmem [resolvable:$true] %s228
          %234 = dma.hbm_to_vmem [thread:$0]  %s227, 6144, %s229, [#allocation9], 384, 384, 24
        $region20: #{tpu_custom_call.1} parent=11 // pred_fallthru
          _
        // Predicated region
        $region21: #{tpu_custom_call.1} parent=11 // pred_check
          %p235 = pneg %p91
        $region22: #{tpu_custom_call.1} parent=11 // pred_check_branch
          %237 = sbr.rel (%p235) target = $region24
        $region23: #{tpu_custom_call.1} parent=11 // pred_region
          %239 = vsyncadd [#allocation9], 0
          %s240 = sshll.u32 %s2, 4
          %s241 = int_to_ptr.hbm [resolvable:$true] %s240
          %s242 = sshll.u32 [#allocation10], 4
          %s243 = int_to_ptr.vmem [resolvable:$true] %s242
          %248 = dma.hbm_to_vmem [thread:$0]  %s241, 768, %s243, [#allocation9], 384, 384, 24
        $region24: #{tpu_custom_call.1} parent=11 // pred_fallthru
          _
        // Predicated region
        $region25: #{tpu_custom_call.1} parent=11 // pred_check
          %p249 = pneg %p112
        $region26: #{tpu_custom_call.1} parent=11 // pred_check_branch
          %251 = sbr.rel (%p249) target = $region28
        $region27: #{tpu_custom_call.1} parent=11 // pred_region
          %253 = vsyncadd [#allocation12], 0
          %s254 = sshll.u32 %s3, 4
          %s255 = int_to_ptr.hbm [resolvable:$true] %s254
          %s256 = sshll.u32 [#allocation11], 4
          %s257 = int_to_ptr.vmem [resolvable:$true] %s256
          %262 = dma.hbm_to_vmem [thread:$0]  %s255, 384, %s257, [#allocation12], 192, 192, 12
        $region28: #{tpu_custom_call.1} parent=11 // pred_fallthru
          _
      $region12: #{tpu_custom_call.1} parent=5 // pred_fallthru
        _
      %p263 = scmp.lt.s32.totalorder %s16, 2
      // Predicated region
      $region29: #{tpu_custom_call.1} parent=5 // pred_check
        %p264 = pneg %p263
      $region30: #{tpu_custom_call.1} parent=5 // pred_check_branch
        %266 = sbr.rel (%p264) target = $region32
      $region31: #{tpu_custom_call.1} parent=5 // pred_region
        // Predicated region
        $region33: #{tpu_custom_call.1} parent=31 // pred_check
          %p267 = pneg %p134
        $region34: #{tpu_custom_call.1} parent=31 // pred_check_branch
          %269 = sbr.rel (%p267) target = $region36
        $region35: #{tpu_custom_call.1} parent=31 // pred_region
          %s270 = sand.u32 %s16, 1
          %s271 = scalar_lea.sflag [#allocation7], %s270
          %s272 = sand.u32 %s124, 1
          %s273 = smul.addr %s272, 192
          %s274 = scalar_lea.vmem [#allocation13], %s273
          %s275 = sadd.s32 %s23, %s24
          %s276 = smul.u32 16, %s275
          %278 = vsyncadd %s271, 0
          %s279 = smul.addr %s276, 3
          %s280 = smul.addr %s279, 4
          %s281 = scalar_lea.hbm %s4, %s280
          %s282 = sshll.u32 %s281, 4
          %s283 = int_to_ptr.hbm [resolvable:$true] %s282
          %s284 = sshll.u32 %s274, 4
          %s285 = int_to_ptr.vmem [resolvable:$true] %s284
          %290 = dma.hbm_to_vmem [thread:$0]  %s283, 3072, %s285, %s271, 192, 192, 12
        $region36: #{tpu_custom_call.1} parent=31 // pred_fallthru
          _
      $region32: #{tpu_custom_call.1} parent=5 // pred_fallthru
        _
      %p291 = scmp.le.s32.totalorder 1, %s16
      %p292 = scmp.lt.s32.totalorder %s16, 3
      %p293 = pnand %p291, %p292
      %p294 = pneg %p293
      // Predicated region
      $region37: #{tpu_custom_call.1} parent=5 // pred_check
        _
      $region38: #{tpu_custom_call.1} parent=5 // pred_check_branch
        %296 = sbr.rel (%p293) target = $region40
      $region39: #{tpu_custom_call.1} parent=5 // pred_region
        %s297 = ssub.s32 %s16, 1
        // Predicated region
        $region41: #{tpu_custom_call.1} parent=39 // pred_check
          %p298 = pneg %p49
        $region42: #{tpu_custom_call.1} parent=39 // pred_check_branch
          %300 = sbr.rel (%p298) target = $region44
        $region43: #{tpu_custom_call.1} parent=39 // pred_region
          %302 = dma.done [#allocation7], 256
        $region44: #{tpu_custom_call.1} parent=39 // pred_fallthru
          _
        // Predicated region
        $region45: #{tpu_custom_call.1} parent=39 // pred_check
          %p303 = pneg %p70
        $region46: #{tpu_custom_call.1} parent=39 // pred_check_branch
          %305 = sbr.rel (%p303) target = $region48
        $region47: #{tpu_custom_call.1} parent=39 // pred_region
          %307 = dma.done [#allocation9], 6144
        $region48: #{tpu_custom_call.1} parent=39 // pred_fallthru
          _
        // Predicated region
        $region49: #{tpu_custom_call.1} parent=39 // pred_check
          %p308 = pneg %p91
        $region50: #{tpu_custom_call.1} parent=39 // pred_check_branch
          %310 = sbr.rel (%p308) target = $region52
        $region51: #{tpu_custom_call.1} parent=39 // pred_region
          %312 = dma.done [#allocation9], 768
        $region52: #{tpu_custom_call.1} parent=39 // pred_fallthru
          _
        // Predicated region
        $region53: #{tpu_custom_call.1} parent=39 // pred_check
          %p313 = pneg %p112
        $region54: #{tpu_custom_call.1} parent=39 // pred_check_branch
          %315 = sbr.rel (%p313) target = $region56
        $region55: #{tpu_custom_call.1} parent=39 // pred_region
          %317 = dma.done [#allocation12], 384
        $region56: #{tpu_custom_call.1} parent=39 // pred_fallthru
          _
        %s318 = sand.u32 %s21, 1
        %s319 = scalar_lea.sflag [#allocation7], %s318
        %s320 = sand.u32 %s127, 1
        %s321 = smul.addr %s320, 192
        %s322 = scalar_lea.vmem [#allocation13], %s321
        // Predicated region
        $region57: #{tpu_custom_call.1} parent=39 // pred_check
          %p323 = pneg %p140
        $region58: #{tpu_custom_call.1} parent=39 // pred_check_branch
          %325 = sbr.rel (%p323) target = $region60
        $region59: #{tpu_custom_call.1} parent=39 // pred_region
          %327 = dma.done %s319, 3072
        $region60: #{tpu_custom_call.1} parent=39 // pred_fallthru
          _
        %p328 = pneg %p49
        %p329 = pneg %p46
        %p330 = pneg %p70
        %p331 = pneg %p67
        %p332 = pneg %p91
        %p333 = pneg %p88
        %p334 = pneg %p112
        %p335 = pneg %p109
        %s336 = sand.u32 %s21, 1
        %s337 = scalar_lea.sflag [#allocation7], %s336
        %s338 = sand.u32 %s127, 1
        %s339 = smul.addr %s338, 192
        %s340 = scalar_lea.vmem [#allocation13], %s339
        %p341 = pneg %p140
        %p342 = pneg %p137
        %p343 = pneg %p166
        %p344 = pneg %p163
        %p345 = scmp.lt.s32.totalorder %s25, 1
        %s346 = scalar_select %p345, %s25, 1
        %s347 = smul.addr %s346, 2
        %s348 = smul.addr %s347, 8
        %s349 = scalar_lea.vmem %s5, %s348
        %p350 = pneg %p192
        %p351 = pneg %p189
        %p352 = scmp.lt.s32.totalorder %s25, 1
        %s353 = scalar_select %p352, %s25, 1
        %s354 = smul.addr %s353, 2
        %s355 = smul.addr %s354, 8
        %s356 = scalar_lea.vmem %s6, %s355
        %s357 = sadd.s32 %s25, %s26
        %s358 = smul.u32 16, %s357
        %p359 = scmp.lt.s32.totalorder %s25, 1
        %s360 = scalar_select %p359, %s25, 1
        %s361 = smul.addr %s360, 2
        %s362 = smul.addr %s361, 8
        %s363 = scalar_lea.vmem %s5, %s362
        %p364 = scmp.lt.s32.totalorder %s25, 1
        %s365 = scalar_select %p364, %s25, 1
        %s366 = smul.addr %s365, 2
        %s367 = smul.addr %s366, 8
        %s368 = scalar_lea.vmem %s6, %s367
        %p369 = scmp.eq.s32.totalorder %s26, 0
        // Predicated region
        $region61: #{tpu_custom_call.1} parent=39 // pred_check
          %p370 = pneg %p369
        $region62: #{tpu_custom_call.1} parent=39 // pred_check_branch
          %372 = sbr.rel (%p370) target = $region64
        $region63: #{tpu_custom_call.1} parent=39 // pred_region
          %v373 = vld [vmem:[#allocation6] sm:$0xff]
          %v374 = vld [vmem:[#allocation6 + $0x8] sm:$0xff]
          %v375 = vld [vmem:[#allocation8] sm:$0xff]
          %v376 = vld [vmem:[#allocation8 + $0x8] sm:$0xff]
          %v377 = vld [vmem:[#allocation8 + $0x10] sm:$0xff]
          %v378 = vld [vmem:[#allocation8 + $0x18] sm:$0xff]
          %v379 = vld [vmem:[#allocation8 + $0x20] sm:$0xff]
          %v380 = vld [vmem:[#allocation8 + $0x28] sm:$0xff]
          %v381 = vld [vmem:[#allocation8 + $0x30] sm:$0xff]
          %v382 = vld [vmem:[#allocation8 + $0x38] sm:$0xff]
          %v383 = vld [vmem:[#allocation8 + $0x40] sm:$0xff]
          %v384 = vld [vmem:[#allocation8 + $0x48] sm:$0xff]
          %v385 = vld [vmem:[#allocation8 + $0x50] sm:$0xff]
          %v386 = vld [vmem:[#allocation8 + $0x58] sm:$0xff]
          %v387 = vld [vmem:[#allocation8 + $0x60] sm:$0xff]
          %v388 = vld [vmem:[#allocation8 + $0x68] sm:$0xff]
          %v389 = vld [vmem:[#allocation8 + $0x70] sm:$0xff]
          %v390 = vld [vmem:[#allocation8 + $0x78] sm:$0xff]
          %v391 = vld [vmem:[#allocation8 + $0x80] sm:$0xff]
          %v392 = vld [vmem:[#allocation8 + $0x88] sm:$0xff]
          %v393 = vld [vmem:[#allocation8 + $0x90] sm:$0xff]
          %v394 = vld [vmem:[#allocation8 + $0x98] sm:$0xff]
          %v395 = vld [vmem:[#allocation8 + $0xa0] sm:$0xff]
          %v396 = vld [vmem:[#allocation8 + $0xa8] sm:$0xff]
          %v397 = vld [vmem:[#allocation8 + $0xb0] sm:$0xff]
          %v398 = vld [vmem:[#allocation8 + $0xb8] sm:$0xff]
          %v399 = vld [vmem:[#allocation8 + $0xc0] sm:$0xff]
          %v400 = vld [vmem:[#allocation8 + $0xc8] sm:$0xff]
          %v401 = vld [vmem:[#allocation8 + $0xd0] sm:$0xff]
          %v402 = vld [vmem:[#allocation8 + $0xd8] sm:$0xff]
          %v403 = vld [vmem:[#allocation8 + $0xe0] sm:$0xff]
          %v404 = vld [vmem:[#allocation8 + $0xe8] sm:$0xff]
          %v405 = vld [vmem:[#allocation8 + $0xf0] sm:$0xff]
          %v406 = vld [vmem:[#allocation8 + $0xf8] sm:$0xff]
          %v407 = vld [vmem:[#allocation8 + $0x100] sm:$0xff]
          %v408 = vld [vmem:[#allocation8 + $0x108] sm:$0xff]
          %v409 = vld [vmem:[#allocation8 + $0x110] sm:$0xff]
          %v410 = vld [vmem:[#allocation8 + $0x118] sm:$0xff]
          %v411 = vld [vmem:[#allocation8 + $0x120] sm:$0xff]
          %v412 = vld [vmem:[#allocation8 + $0x128] sm:$0xff]
          %v413 = vld [vmem:[#allocation8 + $0x130] sm:$0xff]
          %v414 = vld [vmem:[#allocation8 + $0x138] sm:$0xff]
          %v415 = vld [vmem:[#allocation8 + $0x140] sm:$0xff]
          %v416 = vld [vmem:[#allocation8 + $0x148] sm:$0xff]
          %v417 = vld [vmem:[#allocation8 + $0x150] sm:$0xff]
          %v418 = vld [vmem:[#allocation8 + $0x158] sm:$0xff]
          %v419 = vld [vmem:[#allocation8 + $0x160] sm:$0xff]
          %v420 = vld [vmem:[#allocation8 + $0x168] sm:$0xff]
          %v421 = vld [vmem:[#allocation8 + $0x170] sm:$0xff]
          %v422 = vld [vmem:[#allocation8 + $0x178] sm:$0xff]
          %v423 = vld [vmem:[#allocation10] sm:$0xff]
          %v424 = vld [vmem:[#allocation10 + $0x8] sm:$0xff]
          %v425 = vld [vmem:[#allocation10 + $0x10] sm:$0xff]
          %v426 = vld [vmem:[#allocation10 + $0x18] sm:$0xff]
          %v427 = vld [vmem:[#allocation10 + $0x20] sm:$0xff]
          %v428 = vld [vmem:[#allocation10 + $0x28] sm:$0xff]
          %429 = vmatpush.msra.mxu0 %v420
          %430 = vmatpush.msra.mxu0 %v417
          %431 = vmatpush.msra.mxu0 %v414
          %432 = vmatpush.msra.mxu0 %v411
          %433 = vmatpush.msra.mxu0 %v408
          %434 = vmatpush.msra.mxu0 %v405
          %435 = vmatpush.msra.mxu0 %v402
          %436 = vmatpush.msra.mxu0 %v399
          %437 = vmatpush.msra.mxu0 %v396
          %438 = vmatpush.msra.mxu0 %v393
          %439 = vmatpush.msra.mxu0 %v390
          %440 = vmatpush.msra.mxu0 %v387
          %441 = vmatpush.msra.mxu0 %v384
          %442 = vmatpush.msra.mxu0 %v381
          %443 = vmatpush.msra.mxu0 %v378
          %444 = vmatpush.msra.mxu0 %v375
          %445 = vmatmul.f32.gmra.mxu0 %v373
          %v446 = vpop.f32.mrf.mxu0
          %v447 = vadd.f32 %v423, %v446
          %448 = vmatmul.f32.gmra.mxu0 %v374
          %v449 = vpop.f32.mrf.mxu0
          %v450 = vadd.f32 %v426, %v449
          %451 = vdwg.mxu0
          %452 = vmatpush.msra.mxu0 %v421
          %453 = vmatpush.msra.mxu0 %v418
          %454 = vmatpush.msra.mxu0 %v415
          %455 = vmatpush.msra.mxu0 %v412
          %456 = vmatpush.msra.mxu0 %v409
          %457 = vmatpush.msra.mxu0 %v406
          %458 = vmatpush.msra.mxu0 %v403
          %459 = vmatpush.msra.mxu0 %v400
          %460 = vmatpush.msra.mxu0 %v397
          %461 = vmatpush.msra.mxu0 %v394
          %462 = vmatpush.msra.mxu0 %v391
          %463 = vmatpush.msra.mxu0 %v388
          %464 = vmatpush.msra.mxu0 %v385
          %465 = vmatpush.msra.mxu0 %v382
          %466 = vmatpush.msra.mxu0 %v379
          %467 = vmatpush.msra.mxu0 %v376
          %468 = vmatmul.f32.gmra.mxu0 %v373
          %v469 = vpop.f32.mrf.mxu0
          %v470 = vadd.f32 %v424, %v469
          %471 = vmatmul.f32.gmra.mxu0 %v374
          %v472 = vpop.f32.mrf.mxu0
          %v473 = vadd.f32 %v427, %v472
          %474 = vdwg.mxu0
          %475 = vmatpush.msra.mxu0 %v422
          %476 = vmatpush.msra.mxu0 %v419
          %477 = vmatpush.msra.mxu0 %v416
          %478 = vmatpush.msra.mxu0 %v413
          %479 = vmatpush.msra.mxu0 %v410
          %480 = vmatpush.msra.mxu0 %v407
          %481 = vmatpush.msra.mxu0 %v404
          %482 = vmatpush.msra.mxu0 %v401
          %483 = vmatpush.msra.mxu0 %v398
          %484 = vmatpush.msra.mxu0 %v395
          %485 = vmatpush.msra.mxu0 %v392
          %486 = vmatpush.msra.mxu0 %v389
          %487 = vmatpush.msra.mxu0 %v386
          %488 = vmatpush.msra.mxu0 %v383
          %489 = vmatpush.msra.mxu0 %v380
          %490 = vmatpush.msra.mxu0 %v377
          %491 = vmatmul.f32.gmra.mxu0 %v373
          %v492 = vpop.f32.mrf.mxu0
          %v493 = vadd.f32 %v425, %v492
          %494 = vmatmul.f32.gmra.mxu0 %v374
          %v495 = vpop.f32.mrf.mxu0
          %v496 = vadd.f32 %v428, %v495
          %497 = vdwg.mxu0
          %v498 = vpack.c.bf16 %v470, %v447
          %v499 = vpack.c.bf16 %v493, %v493
          %v500 = vpack.c.bf16 %v473, %v450
          %v501 = vpack.c.bf16 %v496, %v496
          %502 = vst [vmem:[#allocation2] sm:$0xff] %v498
          %503 = vst [vmem:[#allocation2 + $0x8] sm:$0xf] %v499
          %504 = vst [vmem:[#allocation2 + $0xc] sm:$0xff] %v500
          %505 = vst [vmem:[#allocation2 + $0x14] sm:$0xf] %v501
          %vm506 = vcmask 7168
          %507 = vst.msk [vmem:[#allocation3] sm:$0xff] %vm506, -1e+30
          %508 = vst.msk [vmem:[#allocation3 + $0x8] sm:$0xff] %vm506, -1e+30
          %509 = vst.msk [vmem:[#allocation4] sm:$0xff] %vm506, 0.0
          %510 = vst.msk [vmem:[#allocation4 + $0x8] sm:$0xff] %vm506, 0.0
          %v511 = vunpack.c.l.bf16 %v498
          %v512 = vunpack.c.h.bf16 %v498
          %v513 = vunpack.c.l.bf16 %v499
          %v514 = vunpack.c.l.bf16 %v500
          %v515 = vunpack.c.h.bf16 %v500
          %v516 = vunpack.c.l.bf16 %v501
          %v517 = vld [vmem:[#allocation11] sm:$0xff]
          %v518 = vld [vmem:[#allocation11 + $0x8] sm:$0xf]
          %v519 = vld [vmem:[#allocation11 + $0xc] sm:$0xff]
          %v520 = vld [vmem:[#allocation11 + $0x14] sm:$0xf]
          %v521 = vunpack.c.l.bf16 %v517
          %v522 = vunpack.c.h.bf16 %v517
          %v523 = vunpack.c.l.bf16 %v518
          %v524 = vunpack.c.l.bf16 %v519
          %v525 = vunpack.c.h.bf16 %v519
          %v526 = vunpack.c.l.bf16 %v520
          %v527 = vmul.f32 %v511, %v521
          %v528 = vmul.f32 %v512, %v522
          %v529 = vmul.f32 %v513, %v523
          %v530 = vmul.f32 %v514, %v524
          %v531 = vmul.f32 %v515, %v525
          %v532 = vmul.f32 %v516, %v526
          %v533 = vadd.f32 %v527, %v528
          %v534 = vadd.f32 %v533, %v529
          %535 = vadd.xlane.f32.xlu0 %v534
          %v536 = vpop.xlane.xlu0 %535
          %v537 = vadd.f32 %v530, %v531
          %v538 = vadd.f32 %v537, %v532
          %539 = vadd.xlane.f32.xlu0 %v538
          %v540 = vpop.xlane.xlu0 %539
          %541 = vst.msk [vmem:[#allocation5] sm:$0xff] %vm506, %v536
          %542 = vst.msk [vmem:[#allocation5 + $0x8] sm:$0xff] %vm506, %v540
        $region64: #{tpu_custom_call.1} parent=39 // pred_fallthru
          _
        %v543 = vld [vmem:[#allocation2] sm:$0xff]
        %v544 = vld [vmem:[#allocation2 + $0x8] sm:$0xf]
        %v545 = vld [vmem:[#allocation2 + $0xc] sm:$0xff]
        %v546 = vld [vmem:[#allocation2 + $0x14] sm:$0xf]
        %v547 = vld [vmem:[%s322] sm:$0xff]
        %v548 = vld [vmem:[%s322 + $0x8] sm:$0xf]
        %v549 = vld [vmem:[%s322 + $0xc] sm:$0xff]
        %v550 = vld [vmem:[%s322 + $0x14] sm:$0xf]
        %v551 = vld [vmem:[%s322 + $0x18] sm:$0xff]
        %v552 = vld [vmem:[%s322 + $0x20] sm:$0xf]
        %v553 = vld [vmem:[%s322 + $0x24] sm:$0xff]
        %v554 = vld [vmem:[%s322 + $0x2c] sm:$0xf]
        %v555 = vld [vmem:[%s322 + $0x30] sm:$0xff]
        %v556 = vld [vmem:[%s322 + $0x38] sm:$0xf]
        %v557 = vld [vmem:[%s322 + $0x3c] sm:$0xff]
        %v558 = vld [vmem:[%s322 + $0x44] sm:$0xf]
        %v559 = vld [vmem:[%s322 + $0x48] sm:$0xff]
        %v560 = vld [vmem:[%s322 + $0x50] sm:$0xf]
        %v561 = vld [vmem:[%s322 + $0x54] sm:$0xff]
        %v562 = vld [vmem:[%s322 + $0x5c] sm:$0xf]
        %v563 = vld [vmem:[%s322 + $0x60] sm:$0xff]
        %v564 = vld [vmem:[%s322 + $0x68] sm:$0xf]
        %v565 = vld [vmem:[%s322 + $0x6c] sm:$0xff]
        %v566 = vld [vmem:[%s322 + $0x74] sm:$0xf]
        %v567 = vld [vmem:[%s322 + $0x78] sm:$0xff]
        %v568 = vld [vmem:[%s322 + $0x80] sm:$0xf]
        %v569 = vld [vmem:[%s322 + $0x84] sm:$0xff]
        %v570 = vld [vmem:[%s322 + $0x8c] sm:$0xf]
        %v571 = vld [vmem:[%s322 + $0x90] sm:$0xff]
        %v572 = vld [vmem:[%s322 + $0x98] sm:$0xf]
        %v573 = vld [vmem:[%s322 + $0x9c] sm:$0xff]
        %v574 = vld [vmem:[%s322 + $0xa4] sm:$0xf]
        %v575 = vld [vmem:[%s322 + $0xa8] sm:$0xff]
        %v576 = vld [vmem:[%s322 + $0xb0] sm:$0xf]
        %v577 = vld [vmem:[%s322 + $0xb4] sm:$0xff]
        %v578 = vld [vmem:[%s322 + $0xbc] sm:$0xf]
        %v583 = vunpack.c.l.b16 %v543
        %v584 = vunpack.c.h.b16 %v543
        %v585 = vunpack.c.l.b16 %v544
        %v586 = vunpack.c.l.b16 %v545
        %v587 = vunpack.c.h.b16 %v545
        %v588 = vunpack.c.l.b16 %v546
        %v589 = vpack.c.b16 %v586, %v583
        %v590 = vpack.c.b16 %v587, %v584
        %v591 = vpack.c.b16 %v588, %v585
        %v627 = vunpack.c.l.b16 %v547
        %v628 = vunpack.c.h.b16 %v547
        %v629 = vunpack.c.l.b16 %v548
        %v630 = vunpack.c.l.b16 %v549
        %v631 = vunpack.c.h.b16 %v549
        %v632 = vunpack.c.l.b16 %v550
        %v633 = vunpack.c.l.b16 %v551
        %v634 = vunpack.c.h.b16 %v551
        %v635 = vunpack.c.l.b16 %v552
        %v636 = vunpack.c.l.b16 %v553
        %v637 = vunpack.c.h.b16 %v553
        %v638 = vunpack.c.l.b16 %v554
        %v639 = vunpack.c.l.b16 %v555
        %v640 = vunpack.c.h.b16 %v555
        %v641 = vunpack.c.l.b16 %v556
        %v642 = vunpack.c.l.b16 %v557
        %v643 = vunpack.c.h.b16 %v557
        %v644 = vunpack.c.l.b16 %v558
        %v645 = vunpack.c.l.b16 %v559
        %v646 = vunpack.c.h.b16 %v559
        %v647 = vunpack.c.l.b16 %v560
        %v648 = vunpack.c.l.b16 %v561
        %v649 = vunpack.c.h.b16 %v561
        %v650 = vunpack.c.l.b16 %v562
        %v651 = vunpack.c.l.b16 %v563
        %v652 = vunpack.c.h.b16 %v563
        %v653 = vunpack.c.l.b16 %v564
        %v654 = vunpack.c.l.b16 %v565
        %v655 = vunpack.c.h.b16 %v565
        %v656 = vunpack.c.l.b16 %v566
        %v657 = vunpack.c.l.b16 %v567
        %v658 = vunpack.c.h.b16 %v567
        %v659 = vunpack.c.l.b16 %v568
        %v660 = vunpack.c.l.b16 %v569
        %v661 = vunpack.c.h.b16 %v569
        %v662 = vunpack.c.l.b16 %v570
        %v663 = vunpack.c.l.b16 %v571
        %v664 = vunpack.c.h.b16 %v571
        %v665 = vunpack.c.l.b16 %v572
        %v666 = vunpack.c.l.b16 %v573
        %v667 = vunpack.c.h.b16 %v573
        %v668 = vunpack.c.l.b16 %v574
        %v669 = vunpack.c.l.b16 %v575
        %v670 = vunpack.c.h.b16 %v575
        %v671 = vunpack.c.l.b16 %v576
        %v672 = vunpack.c.l.b16 %v577
        %v673 = vunpack.c.h.b16 %v577
        %v674 = vunpack.c.l.b16 %v578
        %v675 = vpack.c.b16 %v630, %v627
        %v676 = vpack.c.b16 %v631, %v628
        %v677 = vpack.c.b16 %v632, %v629
        %v678 = vpack.c.b16 %v636, %v633
        %v679 = vpack.c.b16 %v637, %v634
        %v680 = vpack.c.b16 %v638, %v635
        %v681 = vpack.c.b16 %v642, %v639
        %v682 = vpack.c.b16 %v643, %v640
        %v683 = vpack.c.b16 %v644, %v641
        %v684 = vpack.c.b16 %v648, %v645
        %v685 = vpack.c.b16 %v649, %v646
        %v686 = vpack.c.b16 %v650, %v647
        %v687 = vpack.c.b16 %v654, %v651
        %v688 = vpack.c.b16 %v655, %v652
        %v689 = vpack.c.b16 %v656, %v653
        %v690 = vpack.c.b16 %v660, %v657
        %v691 = vpack.c.b16 %v661, %v658
        %v692 = vpack.c.b16 %v662, %v659
        %v693 = vpack.c.b16 %v666, %v663
        %v694 = vpack.c.b16 %v667, %v664
        %v695 = vpack.c.b16 %v668, %v665
        %v696 = vpack.c.b16 %v672, %v669
        %v697 = vpack.c.b16 %v673, %v670
        %v698 = vpack.c.b16 %v674, %v671
        %723 = vmatpush.bf16.xpose.msra.mxu0 %v696
        %724 = vmatpush.bf16.xpose.msra.mxu0 %v693
        %725 = vmatpush.bf16.xpose.msra.mxu0 %v690
        %726 = vmatpush.bf16.xpose.msra.mxu0 %v687
        %727 = vmatpush.bf16.xpose.msra.mxu0 %v684
        %728 = vmatpush.bf16.xpose.msra.mxu0 %v681
        %729 = vmatpush.bf16.xpose.msra.mxu0 %v678
        %730 = vmatpush.bf16.xpose.msra.mxu0 %v675
        %731 = vmatmul.bf16.gmra.mxu0 %v589
        %v732 = vpop.f32.mrf.mxu0
        %v733 = vadd.f32 0.0, %v732
        %v734 = vpop.f32.mrf.mxu0
        %v735 = vadd.f32 0.0, %v734
        %736 = vdwg.mxu0
        %737 = vmatpush.bf16.xpose.msra.mxu0 %v697
        %738 = vmatpush.bf16.xpose.msra.mxu0 %v694
        %739 = vmatpush.bf16.xpose.msra.mxu0 %v691
        %740 = vmatpush.bf16.xpose.msra.mxu0 %v688
        %741 = vmatpush.bf16.xpose.msra.mxu0 %v685
        %742 = vmatpush.bf16.xpose.msra.mxu0 %v682
        %743 = vmatpush.bf16.xpose.msra.mxu0 %v679
        %744 = vmatpush.bf16.xpose.msra.mxu0 %v676
        %745 = vmatmul.bf16.gmra.mxu0 %v590
        %v746 = vpop.f32.mrf.mxu0
        %v747 = vadd.f32 %v733, %v746
        %v748 = vpop.f32.mrf.mxu0
        %v749 = vadd.f32 %v735, %v748
        %750 = vdwg.mxu0
        %751 = vmatpush.bf16.xpose.msra.mxu0 %v698
        %752 = vmatpush.bf16.xpose.msra.mxu0 %v695
        %753 = vmatpush.bf16.xpose.msra.mxu0 %v692
        %754 = vmatpush.bf16.xpose.msra.mxu0 %v689
        %755 = vmatpush.bf16.xpose.msra.mxu0 %v686
        %756 = vmatpush.bf16.xpose.msra.mxu0 %v683
        %757 = vmatpush.bf16.xpose.msra.mxu0 %v680
        %758 = vmatpush.bf16.xpose.msra.mxu0 %v677
        %759 = vmatmul.bf16.gmra.mxu0 %v591
        %v760 = vpop.f32.mrf.mxu0
        %v761 = vadd.f32 %v747, %v760
        %v762 = vpop.f32.mrf.mxu0
        %v763 = vadd.f32 %v749, %v762
        %764 = vdwg.mxu0
        %v765 = vld [vmem:[#allocation3] sm:$0xff]
        %v766 = vld [vmem:[#allocation3 + $0x8] sm:$0xff]
        %767 = vmax.xlane.f32.xlu0 %v761
        %v768 = vpop.xlane.xlu0 %767
        %769 = vmax.xlane.f32.xlu0 %v763
        %v770 = vpop.xlane.xlu0 %769
        %v771 = vmax.f32 %v765, %v768
        %v772 = vmax.f32 %v766, %v770
        %v773 = vsub.f32 %v765, %v771
        %v774 = vsub.f32 %v766, %v772
        %v775 = vmul.f32 %v773, 1.442695
        %v776 = vpow.pop %v775
        %v777 = vmul.f32 %v774, 1.442695
        %v778 = vpow.pop %v777
        %v779 = vld [vmem:[#allocation4] sm:$0xff]
        %v780 = vld [vmem:[#allocation4 + $0x8] sm:$0xff]
        %v781 = vmul.f32 %v776, %v779
        %v782 = vmul.f32 %v778, %v780
        %784 = vset.pattern.permute.xlu0 0
        %785 = vperm.xlu0 %784, %v771
        %v786 = vpop.permute.xlu0 %785
        %789 = vset.pattern.permute.xlu0 0
        %790 = vperm.xlu0 %789, %v772
        %v791 = vpop.permute.xlu0 %790
        %v793 = vsub.f32 %v761, %v786
        %v794 = vsub.f32 %v763, %v791
        %v795 = vmul.f32 %v793, 1.442695
        %v796 = vpow.pop %v795
        %v797 = vmul.f32 %v794, 1.442695
        %v798 = vpow.pop %v797
        %799 = vadd.xlane.f32.xlu0 %v796
        %v800 = vpop.xlane.xlu0 %799
        %801 = vadd.xlane.f32.xlu0 %v798
        %v802 = vpop.xlane.xlu0 %801
        %v803 = vadd.f32 %v781, %v800
        %v804 = vadd.f32 %v782, %v802
        %vm805 = vcmask 7168
        %806 = vst.msk [vmem:[#allocation4] sm:$0xff] %vm805, %v803
        %807 = vst.msk [vmem:[#allocation4 + $0x8] sm:$0xff] %vm805, %v804
        %808 = vst.msk [vmem:[#allocation3] sm:$0xff] %vm805, %v771
        %809 = vst.msk [vmem:[#allocation3 + $0x8] sm:$0xff] %vm805, %v772
        // Predicated region
        $region65: #{tpu_custom_call.1} parent=39 // pred_check
          %p810 = pneg %p369
        $region66: #{tpu_custom_call.1} parent=39 // pred_check_branch
          %812 = sbr.rel (%p810) target = $region68
        $region67: #{tpu_custom_call.1} parent=39 // pred_region
          %v813 = vld [vmem:[#allocation3] sm:$0xff]
          %v814 = vld [vmem:[#allocation3 + $0x8] sm:$0xff]
          %v815 = vld [vmem:[#allocation4] sm:$0xff]
          %v816 = vld [vmem:[#allocation4 + $0x8] sm:$0xff]
          %v817 = vlog2.pop %v815
          %v818 = vmul.f32 %v817, 0.6931472
          %v819 = vlog2.pop %v816
          %v820 = vmul.f32 %v819, 0.6931472
          %v821 = vadd.f32 %v813, %v818
          %v822 = vadd.f32 %v814, %v820
          %823 = vst.msk [vmem:[%s363] sm:$0xff] %vm805, %v821
          %824 = vst.msk [vmem:[%s363 + $0x8] sm:$0xff] %vm805, %v822
          %v825 = vld [vmem:[#allocation5] sm:$0xff]
          %v826 = vld [vmem:[#allocation5 + $0x8] sm:$0xff]
          %827 = vst.msk [vmem:[%s368] sm:$0xff] %vm805, %v825
          %828 = vst.msk [vmem:[%s368 + $0x8] sm:$0xff] %vm805, %v826
        $region68: #{tpu_custom_call.1} parent=39 // pred_fallthru
          _
        %p829 = scmp.lt.s32.totalorder %s25, 1
        %s830 = scalar_select %p829, %s25, 1
        %s831 = smul.addr %s830, 2
        %s832 = smul.addr %s831, 8
        %s833 = scalar_lea.vmem %s5, %s832
        %p834 = scmp.lt.s32.totalorder %s25, 1
        %s835 = scalar_select %p834, %s25, 1
        %s836 = smul.addr %s835, 2
        %s837 = smul.addr %s836, 8
        %s838 = scalar_lea.vmem %s6, %s837
        // Predicated region
        $region69: #{tpu_custom_call.1} parent=39 // pred_check
          %p839 = pneg %p163
        $region70: #{tpu_custom_call.1} parent=39 // pred_check_branch
          %841 = sbr.rel (%p839) target = $region72
        $region71: #{tpu_custom_call.1} parent=39 // pred_region
          _
        $region72: #{tpu_custom_call.1} parent=39 // pred_fallthru
          _
        // Predicated region
        $region73: #{tpu_custom_call.1} parent=39 // pred_check
          %p842 = pneg %p189
        $region74: #{tpu_custom_call.1} parent=39 // pred_check_branch
          %844 = sbr.rel (%p842) target = $region76
        $region75: #{tpu_custom_call.1} parent=39 // pred_region
          _
        $region76: #{tpu_custom_call.1} parent=39 // pred_fallthru
          _
      $region40: #{tpu_custom_call.1} parent=5 // pred_fallthru
        _
      %p845 = scmp.le.s32.totalorder 2, %s16
      // Predicated region
      $region77: #{tpu_custom_call.1} parent=5 // pred_check
        %p846 = pneg %p845
      $region78: #{tpu_custom_call.1} parent=5 // pred_check_branch
        %848 = sbr.rel (%p846) target = $region80
      $region79: #{tpu_custom_call.1} parent=5 // pred_region
        %s849 = ssub.s32 %s16, 2
        // Predicated region
        $region81: #{tpu_custom_call.1} parent=79 // pred_check
          %p850 = pneg %p169
        $region82: #{tpu_custom_call.1} parent=79 // pred_check_branch
          %852 = sbr.rel (%p850) target = $region84
        $region83: #{tpu_custom_call.1} parent=79 // pred_region
          %p853 = scmp.lt.s32.totalorder %s27, 1
          %s854 = scalar_select %p853, %s27, 1
          %s855 = smul.addr %s854, 2
          %s856 = smul.addr %s855, 8
          %s857 = scalar_lea.vmem %s5, %s856
        $region84: #{tpu_custom_call.1} parent=79 // pred_fallthru
          _
        // Predicated region
        $region85: #{tpu_custom_call.1} parent=79 // pred_check
          %p858 = pneg %p195
        $region86: #{tpu_custom_call.1} parent=79 // pred_check_branch
          %860 = sbr.rel (%p858) target = $region88
        $region87: #{tpu_custom_call.1} parent=79 // pred_region
          %p861 = scmp.lt.s32.totalorder %s27, 1
          %s862 = scalar_select %p861, %s27, 1
          %s863 = smul.addr %s862, 2
          %s864 = smul.addr %s863, 8
          %s865 = scalar_lea.vmem %s6, %s864
        $region88: #{tpu_custom_call.1} parent=79 // pred_fallthru
          _
      $region80: #{tpu_custom_call.1} parent=5 // pred_fallthru
        _
    $region6: #{tpu_custom_call.1} parent=1 // loop_footer
      %s20 = sadd.s32 1, %s16
    $region7: #{tpu_custom_call.1} parent=1 // loop_footer_branch
      %15 = sbr.rel target = $region3
    $region8: #{tpu_custom_call.1} parent=1 // loop_exit
      _
    %866 = vsyncpa [#allocation7], 1
    %s867 = scalar_lea.sflag [#allocation7], 1
    %868 = vsyncpa %s867, 1
    %869 = vsyncpa [#allocation9], 1
    %870 = vsyncpa [#allocation12], 1

</llo_original>
